<compile_context>
chip_gen: v6e
topology: v6e:2x2x1
jax: 0.10.0
libtpu: 0.0.40
codegen_flags: <defaults>
</compile_context>

<pallas_src>
import functools

import jax
import jax.numpy as jnp
from jax.experimental import pallas as pl
from jax.experimental.pallas import tpu as pltpu


def _round_up(n, m):
    return ((n + m - 1) // m) * m


def mlp_protein_kernel(x_ref, w1_ref, b1_ref, w2_ref, b2_ref, w3_ref, b3_ref,
                       o_ref):
    """Fused fc1+ReLU -> fc2+ReLU -> fc3 on one (blk, in_dim) batch tile.

    Matmuls run on the MXU with bf16 inputs and f32 accumulation; bias + ReLU
    epilogues stay in f32 (v5e VPU has no bf16).  x arrives as f32 and is cast
    to bf16 in-kernel; intermediates are cast to bf16 and fed directly into
    the next dot (no explicit scratch round-trip).
    """
    bf16 = jnp.bfloat16

    # fc1 + ReLU
    x = x_ref[...].astype(bf16)
    h1 = jnp.dot(x, w1_ref[...], preferred_element_type=jnp.float32)
    h1 = jnp.maximum(h1 + b1_ref[...], 0.0)

    # fc2 + ReLU
    h2 = jnp.dot(h1.astype(bf16), w2_ref[...],
                 preferred_element_type=jnp.float32)
    h2 = jnp.maximum(h2 + b2_ref[...], 0.0)

    # fc3 (no activation)
    out = jnp.dot(h2.astype(bf16), w3_ref[...],
                  preferred_element_type=jnp.float32)
    o_ref[...] = (out + b3_ref[...]).astype(o_ref.dtype)


@functools.partial(jax.jit, static_argnames=("block_b", "out_dtype"))
def mlp_protein_forward(x, w1, b1, w2, b2, w3, b3, *, block_b=512,
                        out_dtype=None):
    B, in_dim = x.shape
    h1_dim = w1.shape[1]
    h2_dim = w2.shape[1]
    out_dim = w3.shape[1]
    out_dtype = x.dtype if out_dtype is None else out_dtype

    # Batch tile: multiple of 16 (bf16 sublane packing), capped at the
    # 16-rounded batch.  Ragged last block is masked by Pallas — no jnp.pad.
    blk = min(_round_up(block_b, 16), _round_up(B, 16))
    grid = (pl.cdiv(B, blk),)

    bf16 = jnp.bfloat16
    # Weights to bf16 (tiny, one cheap pass); biases defensively (1, N) f32.
    w1_in, w2_in, w3_in = (w.astype(bf16) for w in (w1, w2, w3))
    b1_in = jnp.reshape(b1, (1, h1_dim)).astype(jnp.float32)
    b2_in = jnp.reshape(b2, (1, h2_dim)).astype(jnp.float32)
    b3_in = jnp.reshape(b3, (1, out_dim)).astype(jnp.float32)

    # Weights / biases: full-array blocks with constant index_map -> stay
    # resident in VMEM across all grid steps (no re-DMA).
    wspec = lambda r, c: pl.BlockSpec((r, c), lambda i: (0, 0))

    flops = 2 * B * (in_dim * h1_dim + h1_dim * h2_dim + h2_dim * out_dim)
    bytes_accessed = (
        B * in_dim * x.dtype.itemsize                                  # x (f32)
        + (in_dim * h1_dim + h1_dim * h2_dim + h2_dim * out_dim) * 2   # W bf16
        + (h1_dim + h2_dim + out_dim) * 4                              # biases
        + B * out_dim * jnp.dtype(out_dtype).itemsize)                 # output

    return pl.pallas_call(
        mlp_protein_kernel,
        out_shape=jax.ShapeDtypeStruct((B, out_dim), out_dtype),
        grid_spec=pltpu.PrefetchScalarGridSpec(
            num_scalar_prefetch=0,
            grid=grid,
            in_specs=[
                pl.BlockSpec((blk, in_dim), lambda i: (i, 0)),  # x tile (f32)
                wspec(in_dim, h1_dim),   # w1
                wspec(1, h1_dim),        # b1
                wspec(h1_dim, h2_dim),   # w2
                wspec(1, h2_dim),        # b2
                wspec(h2_dim, out_dim),  # w3
                wspec(1, out_dim),       # b3
            ],
            out_specs=pl.BlockSpec((blk, out_dim), lambda i: (i, 0)),
        ),
        compiler_params=pltpu.CompilerParams(
            dimension_semantics=("parallel",)),
        cost_estimate=pl.CostEstimate(
            flops=flops, transcendentals=0, bytes_accessed=bytes_accessed),
    )(x, w1_in, b1_in, w2_in, b2_in, w3_in, b3_in)


def init_linear(key, in_features, out_features, dtype=jnp.float32):
    """Deterministic init mimicking nn.Linear (uniform +-1/sqrt(in))."""
    kw, kb = jax.random.split(key)
    bound = 1.0 / jnp.sqrt(jnp.array(in_features, dtype))
    # Stored directly as (in, out) — the transpose of PyTorch's (out, in),
    # so the kernel computes y = x @ W + b.
    w = jax.random.uniform(kw, (in_features, out_features), dtype,
                           minval=-bound, maxval=bound)
    b = jax.random.uniform(kb, (1, out_features), dtype,
                           minval=-bound, maxval=bound)
    return w, b


def reference_forward(x, w1, b1, w2, b2, w3, b3):
    """Mirrors the kernel's numerics: bf16 MXU inputs, f32 accumulation."""
    bf16 = jnp.bfloat16
    h1 = jnp.dot(x.astype(bf16), w1.astype(bf16),
                 preferred_element_type=jnp.float32)
    h1 = jnp.maximum(h1 + b1, 0.0)
    h2 = jnp.dot(h1.astype(bf16), w2.astype(bf16),
                 preferred_element_type=jnp.float32)
    h2 = jnp.maximum(h2 + b2, 0.0)
    return jnp.dot(h2.astype(bf16), w3.astype(bf16),
                   preferred_element_type=jnp.float32) + b3


if __name__ == "__main__":
    # Shapes consistent with the module defaults: hidden1=hidden2=output=128.
    # B=200 with block_b=128 exercises the no-pad ragged path: 2 grid steps,
    # the second one partial (72 valid rows, masked by Pallas on writeback).
    B, input_size = 200, 64
    hidden1, hidden2, output_size = 128, 128, 128

    key = jax.random.PRNGKey(0)
    kx, k1, k2, k3, k4, k5 = jax.random.split(key, 6)

    x = jax.random.normal(kx, (B, input_size), jnp.float32)

    w1, b1 = init_linear(k1, input_size, hidden1)
    w2, b2 = init_linear(k2, hidden1, hidden2)
    w3, b3 = init_linear(k3, hidden2, output_size)
    # Unused in forward (defined only for parity with the PyTorch __init__):
    w_proj, b_proj = init_linear(k4, output_size, hidden1)
    w4, b4 = init_linear(k5, hidden1, output_size)

    out = mlp_protein_forward(x, w1, b1, w2, b2, w3, b3, block_b=128)
    out = jax.block_until_ready(out)

    ref = reference_forward(x, w1, b1, w2, b2, w3, b3)
    assert out.shape == (B, output_size)
    assert jnp.allclose(out, ref, atol=2e-2, rtol=2e-2), "mismatch vs reference"

    print("KERNEL_OK")
</pallas_src>

<mosaic_0001>
module attributes {stable_mosaic.version = 11 : i64} {
  func.func @mlp_protein_kernel(%arg0: i32, %arg1: memref<128x64xf32, #tpu.memory_space<vmem>>, %arg2: memref<64x128xbf16, #tpu.memory_space<vmem>>, %arg3: memref<1x128xf32, #tpu.memory_space<vmem>>, %arg4: memref<128x128xbf16, #tpu.memory_space<vmem>>, %arg5: memref<1x128xf32, #tpu.memory_space<vmem>>, %arg6: memref<128x128xbf16, #tpu.memory_space<vmem>>, %arg7: memref<1x128xf32, #tpu.memory_space<vmem>>, %arg8: memref<128x128xf32, #tpu.memory_space<vmem>>) attributes {dimension_semantics = [#tpu.dimension_semantics<parallel>], iteration_bounds = array<i64: 2>, scalar_prefetch = 0 : i64, scratch_operands = 0 : i64, tpu.core_type = #tpu.core_type<tc>, window_params = [{transform_indices = @transform_0, window_bounds = array<i64: 128, 64>}, {pipeline_mode = #tpu.pipeline_mode<synchronous>, transform_indices = @transform_1, window_bounds = array<i64: 64, 128>}, {pipeline_mode = #tpu.pipeline_mode<synchronous>, transform_indices = @transform_2, window_bounds = array<i64: 1, 128>}, {pipeline_mode = #tpu.pipeline_mode<synchronous>, transform_indices = @transform_3, window_bounds = array<i64: 128, 128>}, {pipeline_mode = #tpu.pipeline_mode<synchronous>, transform_indices = @transform_4, window_bounds = array<i64: 1, 128>}, {pipeline_mode = #tpu.pipeline_mode<synchronous>, transform_indices = @transform_5, window_bounds = array<i64: 128, 128>}, {pipeline_mode = #tpu.pipeline_mode<synchronous>, transform_indices = @transform_6, window_bounds = array<i64: 1, 128>}, {transform_indices = @transform_7, window_bounds = array<i64: 128, 128>}]} {
    %c0 = arith.constant 0 : index
    %c0_0 = arith.constant 0 : index
    %0 = vector.load %arg1[%c0, %c0_0] : memref<128x64xf32, #tpu.memory_space<vmem>>, vector<128x64xf32>
    %1 = arith.truncf %0 : vector<128x64xf32> to vector<128x64xbf16>
    %c0_1 = arith.constant 0 : index
    %c0_2 = arith.constant 0 : index
    %2 = vector.load %arg2[%c0_1, %c0_2] : memref<64x128xbf16, #tpu.memory_space<vmem>>, vector<64x128xbf16>
    %cst = arith.constant dense<0.000000e+00> : vector<128x128xf32>
    %3 = tpu.matmul %1, %2, %cst {dimension_numbers = #tpu.dot_dimension_numbers<[1], [0], [0], [1], [0, 0, 1, 1], [], []>} : vector<128x64xbf16>, vector<64x128xbf16>, vector<128x128xf32> -> vector<128x128xf32>
    %c0_3 = arith.constant 0 : index
    %c0_4 = arith.constant 0 : index
    %4 = vector.load %arg3[%c0_3, %c0_4] : memref<1x128xf32, #tpu.memory_space<vmem>>, vector<1x128xf32>
    %5 = vector.broadcast %4 : vector<1x128xf32> to vector<128x128xf32>
    %6 = arith.addf %3, %5 : vector<128x128xf32>
    %cst_5 = arith.constant 0.000000e+00 : f32
    %7 = vector.broadcast %cst_5 : f32 to vector<128x128xf32>
    %8 = arith.maximumf %6, %7 : vector<128x128xf32>
    %9 = arith.truncf %8 : vector<128x128xf32> to vector<128x128xbf16>
    %c0_6 = arith.constant 0 : index
    %c0_7 = arith.constant 0 : index
    %10 = vector.load %arg4[%c0_6, %c0_7] : memref<128x128xbf16, #tpu.memory_space<vmem>>, vector<128x128xbf16>
    %cst_8 = arith.constant dense<0.000000e+00> : vector<128x128xf32>
    %11 = tpu.matmul %9, %10, %cst_8 {dimension_numbers = #tpu.dot_dimension_numbers<[1], [0], [0], [1], [0, 0, 1, 1], [], []>} : vector<128x128xbf16>, vector<128x128xbf16>, vector<128x128xf32> -> vector<128x128xf32>
    %c0_9 = arith.constant 0 : index
    %c0_10 = arith.constant 0 : index
    %12 = vector.load %arg5[%c0_9, %c0_10] : memref<1x128xf32, #tpu.memory_space<vmem>>, vector<1x128xf32>
    %13 = vector.broadcast %12 : vector<1x128xf32> to vector<128x128xf32>
    %14 = arith.addf %11, %13 : vector<128x128xf32>
    %cst_11 = arith.constant 0.000000e+00 : f32
    %15 = vector.broadcast %cst_11 : f32 to vector<128x128xf32>
    %16 = arith.maximumf %14, %15 : vector<128x128xf32>
    %17 = arith.truncf %16 : vector<128x128xf32> to vector<128x128xbf16>
    %c0_12 = arith.constant 0 : index
    %c0_13 = arith.constant 0 : index
    %18 = vector.load %arg6[%c0_12, %c0_13] : memref<128x128xbf16, #tpu.memory_space<vmem>>, vector<128x128xbf16>
    %cst_14 = arith.constant dense<0.000000e+00> : vector<128x128xf32>
    %19 = tpu.matmul %17, %18, %cst_14 {dimension_numbers = #tpu.dot_dimension_numbers<[1], [0], [0], [1], [0, 0, 1, 1], [], []>} : vector<128x128xbf16>, vector<128x128xbf16>, vector<128x128xf32> -> vector<128x128xf32>
    %c0_15 = arith.constant 0 : index
    %c0_16 = arith.constant 0 : index
    %20 = vector.load %arg7[%c0_15, %c0_16] : memref<1x128xf32, #tpu.memory_space<vmem>>, vector<1x128xf32>
    %21 = vector.broadcast %20 : vector<1x128xf32> to vector<128x128xf32>
    %22 = arith.addf %19, %21 : vector<128x128xf32>
    %c0_17 = arith.constant 0 : index
    %c0_18 = arith.constant 0 : index
    %23 = vector.load %arg8[%c0_17, %c0_18] : memref<128x128xf32, #tpu.memory_space<vmem>>, vector<128x128xf32>
    tpu.vector_store %arg8[%c0_17, %c0_18], %22 {strides = array<i32>} : memref<128x128xf32, #tpu.memory_space<vmem>>, vector<128x128xf32>,
    return
  }
  func.func @transform_0(%arg0: i32) -> (i32, i32) {
    %c0_i32 = arith.constant 0 : i32
    %c0_i32_0 = arith.constant 0 : i32
    return %arg0, %c0_i32 : i32, i32
  }
  func.func @transform_1(%arg0: i32) -> (i32, i32) {
    %c0_i32 = arith.constant 0 : i32
    %c0_i32_0 = arith.constant 0 : i32
    %c0_i32_1 = arith.constant 0 : i32
    return %c0_i32, %c0_i32_0 : i32, i32
  }
  func.func @transform_2(%arg0: i32) -> (i32, i32) {
    %c0_i32 = arith.constant 0 : i32
    %c0_i32_0 = arith.constant 0 : i32
    %c0_i32_1 = arith.constant 0 : i32
    return %c0_i32, %c0_i32_0 : i32, i32
  }
  func.func @transform_3(%arg0: i32) -> (i32, i32) {
    %c0_i32 = arith.constant 0 : i32
    %c0_i32_0 = arith.constant 0 : i32
    %c0_i32_1 = arith.constant 0 : i32
    return %c0_i32, %c0_i32_0 : i32, i32
  }
  func.func @transform_4(%arg0: i32) -> (i32, i32) {
    %c0_i32 = arith.constant 0 : i32
    %c0_i32_0 = arith.constant 0 : i32
    %c0_i32_1 = arith.constant 0 : i32
    return %c0_i32, %c0_i32_0 : i32, i32
  }
  func.func @transform_5(%arg0: i32) -> (i32, i32) {
    %c0_i32 = arith.constant 0 : i32
    %c0_i32_0 = arith.constant 0 : i32
    %c0_i32_1 = arith.constant 0 : i32
    return %c0_i32, %c0_i32_0 : i32, i32
  }
  func.func @transform_6(%arg0: i32) -> (i32, i32) {
    %c0_i32 = arith.constant 0 : i32
    %c0_i32_0 = arith.constant 0 : i32
    %c0_i32_1 = arith.constant 0 : i32
    return %c0_i32, %c0_i32_0 : i32, i32
  }
  func.func @transform_7(%arg0: i32) -> (i32, i32) {
    %c0_i32 = arith.constant 0 : i32
    %c0_i32_0 = arith.constant 0 : i32
    return %arg0, %c0_i32 : i32, i32
  }
}

</mosaic_0001>

<llo_original>
// kernel: mlp_protein_forward.1
$region0: #{mlp_protein_forward.1}
  #allocation0 [shape = 'u32[]', space=smem, size = 0x4, offset = 0x4, fixed_abs, tag = 'smem constant byte address 0x4 - core index']
  #allocation1 [shape = 'u32[144,128]{1,0:T(1,128)}', space=vmem, size = 0x12000, scoped, tag = 'internal scratch']
  %s0 = inlined_call_operand.vmem [shape: f32[200,64], index: 0, kind: input, shape index: {}]
  %s1 = inlined_call_operand.vmem [shape: bf16[64,128], index: 1, kind: input, shape index: {}]
  %s2 = inlined_call_operand.vmem [shape: f32[1,128], index: 2, kind: input, shape index: {}]
  %s3 = inlined_call_operand.vmem [shape: bf16[128,128], index: 3, kind: input, shape index: {}]
  %s4 = inlined_call_operand.vmem [shape: f32[1,128], index: 4, kind: input, shape index: {}]
  %s5 = inlined_call_operand.vmem [shape: bf16[128,128], index: 5, kind: input, shape index: {}]
  %s6 = inlined_call_operand.vmem [shape: f32[1,128], index: 6, kind: input, shape index: {}]
  %s7 = inlined_call_operand.hbm [shape: f32[200,128], index: 7, kind: output, shape index: {}]
  %s8 = sld [smem:[#allocation0]]
  $region61: #{mlp_protein_forward.1} parent=0
    _
  %s10 = ssub.s32 1, %s8
  %s11 = scalar_select 0, %s10, %s8
  $region1: #{mlp_protein_forward.1} parent=0
    #allocation2 [shape = 'u8[131072]{0}', space=vmem, size = 0x20000, scoped, tag = 'output window, operand 0']
    #allocation3 [shape = 's32[2]{0}', space=sflag, size = 0x8, scoped, tag = 'scoped memory for mlp_protein_forward.1']
    %12 = vsyncpa [#allocation3], 0
    %s13 = scalar_lea.sflag [#allocation3], 1
    %14 = vsyncpa %s13, 0
    loop: start=0, step=1, limit=4
    $region2: #{mlp_protein_forward.1} parent=1 // loop_pre_header
      _
    $region3: #{mlp_protein_forward.1} parent=1 // loop_header
      %s16 = sphi 0, %s20
      %p17 = scmp.ge.s32.totalorder %s16, 4
      %s26 = sphi 0, %s28
      %s29 = sphi 0, %s26
      %s30 = sphi 0, %s29
      %s46 = sphi 0, %s30
      %s50 = sphi 0, %s50
      %s52 = sphi 0, %s50
      %s53 = sphi 0, %s52
      %s67 = sphi 0, %s53
      %s71 = sphi 0, %s71
      %s73 = sphi 0, %s71
      %s74 = sphi 0, %s73
      %s88 = sphi 0, %s74
      %s92 = sphi 0, %s92
      %s94 = sphi 0, %s92
      %s95 = sphi 0, %s94
      %s109 = sphi 0, %s95
      %s113 = sphi 0, %s113
      %s115 = sphi 0, %s113
      %s116 = sphi 0, %s115
      %s130 = sphi 0, %s116
      %s134 = sphi 0, %s134
      %s136 = sphi 0, %s134
      %s137 = sphi 0, %s136
      %s151 = sphi 0, %s137
      %s155 = sphi 0, %s155
      %s157 = sphi 0, %s155
      %s158 = sphi 0, %s157
      %s172 = sphi 0, %s158
      %s178 = sphi 0, %s180
      %s181 = sphi 0, %s178
      %s182 = sphi 0, %s181
      %s198 = sphi 0, %s182
    $region4: #{mlp_protein_forward.1} parent=1 // loop_header_branch
      %19 = sbr.rel (%p17) target = $region8
    $region5: #{mlp_protein_forward.1} parent=1 // loop_body
      %s21 = ssub.s32 %s16, 1
      %s22 = ssub.s32 %s16, 2
      %s23 = sadd.s32 %s16, 1
      %s24 = ssub.s32 %s16, %s23
      %p25 = scmp.eq.s32.totalorder %s24, 0
      %s27 = sadd.s32 %s26, 1
      %s28 = scalar_select %p25, %s26, %s27
      %p31 = pneg %p25
      %p32 = scmp.eq.s32.totalorder %s16, 1
      %p33 = por %p31, %p32
      %p34 = scmp.ne.s32.totalorder %s26, %s29
      %p35 = scmp.eq.s32.totalorder %s16, 0
      %p36 = por %p34, %p35
      %p37 = scmp.ne.s32.totalorder %s26, %s29
      %p38 = scmp.eq.s32.totalorder %s21, 1
      %p39 = por %p37, %p38
      %p40 = scmp.ne.s32.totalorder %s29, %s30
      %p41 = scmp.eq.s32.totalorder %s21, 0
      %p42 = por %p40, %p41
      %p43 = scmp.ne.s32.totalorder %s29, %s30
      %p44 = scmp.eq.s32.totalorder %s22, 1
      %p45 = por %p43, %p44
      %p47 = scmp.ne.s32.totalorder %s30, %s46
      %p48 = scmp.eq.s32.totalorder %s22, 0
      %p49 = por %p47, %p48
      %s51 = sadd.s32 %s50, 1
      %p54 = scmp.eq.s32.totalorder %s16, 1
      %p55 = scmp.ne.s32.totalorder %s50, %s52
      %p56 = scmp.eq.s32.totalorder %s16, 0
      %p57 = por %p55, %p56
      %p58 = scmp.ne.s32.totalorder %s50, %s52
      %p59 = scmp.eq.s32.totalorder %s21, 1
      %p60 = por %p58, %p59
      %p61 = scmp.ne.s32.totalorder %s52, %s53
      %p62 = scmp.eq.s32.totalorder %s21, 0
      %p63 = por %p61, %p62
      %p64 = scmp.ne.s32.totalorder %s52, %s53
      %p65 = scmp.eq.s32.totalorder %s22, 1
      %p66 = por %p64, %p65
      %p68 = scmp.ne.s32.totalorder %s53, %s67
      %p69 = scmp.eq.s32.totalorder %s22, 0
      %p70 = por %p68, %p69
      %s72 = sadd.s32 %s71, 1
      %p75 = scmp.eq.s32.totalorder %s16, 1
      %p76 = scmp.ne.s32.totalorder %s71, %s73
      %p77 = scmp.eq.s32.totalorder %s16, 0
      %p78 = por %p76, %p77
      %p79 = scmp.ne.s32.totalorder %s71, %s73
      %p80 = scmp.eq.s32.totalorder %s21, 1
      %p81 = por %p79, %p80
      %p82 = scmp.ne.s32.totalorder %s73, %s74
      %p83 = scmp.eq.s32.totalorder %s21, 0
      %p84 = por %p82, %p83
      %p85 = scmp.ne.s32.totalorder %s73, %s74
      %p86 = scmp.eq.s32.totalorder %s22, 1
      %p87 = por %p85, %p86
      %p89 = scmp.ne.s32.totalorder %s74, %s88
      %p90 = scmp.eq.s32.totalorder %s22, 0
      %p91 = por %p89, %p90
      %s93 = sadd.s32 %s92, 1
      %p96 = scmp.eq.s32.totalorder %s16, 1
      %p97 = scmp.ne.s32.totalorder %s92, %s94
      %p98 = scmp.eq.s32.totalorder %s16, 0
      %p99 = por %p97, %p98
      %p100 = scmp.ne.s32.totalorder %s92, %s94
      %p101 = scmp.eq.s32.totalorder %s21, 1
      %p102 = por %p100, %p101
      %p103 = scmp.ne.s32.totalorder %s94, %s95
      %p104 = scmp.eq.s32.totalorder %s21, 0
      %p105 = por %p103, %p104
      %p106 = scmp.ne.s32.totalorder %s94, %s95
      %p107 = scmp.eq.s32.totalorder %s22, 1
      %p108 = por %p106, %p107
      %p110 = scmp.ne.s32.totalorder %s95, %s109
      %p111 = scmp.eq.s32.totalorder %s22, 0
      %p112 = por %p110, %p111
      %s114 = sadd.s32 %s113, 1
      %p117 = scmp.eq.s32.totalorder %s16, 1
      %p118 = scmp.ne.s32.totalorder %s113, %s115
      %p119 = scmp.eq.s32.totalorder %s16, 0
      %p120 = por %p118, %p119
      %p121 = scmp.ne.s32.totalorder %s113, %s115
      %p122 = scmp.eq.s32.totalorder %s21, 1
      %p123 = por %p121, %p122
      %p124 = scmp.ne.s32.totalorder %s115, %s116
      %p125 = scmp.eq.s32.totalorder %s21, 0
      %p126 = por %p124, %p125
      %p127 = scmp.ne.s32.totalorder %s115, %s116
      %p128 = scmp.eq.s32.totalorder %s22, 1
      %p129 = por %p127, %p128
      %p131 = scmp.ne.s32.totalorder %s116, %s130
      %p132 = scmp.eq.s32.totalorder %s22, 0
      %p133 = por %p131, %p132
      %s135 = sadd.s32 %s134, 1
      %p138 = scmp.eq.s32.totalorder %s16, 1
      %p139 = scmp.ne.s32.totalorder %s134, %s136
      %p140 = scmp.eq.s32.totalorder %s16, 0
      %p141 = por %p139, %p140
      %p142 = scmp.ne.s32.totalorder %s134, %s136
      %p143 = scmp.eq.s32.totalorder %s21, 1
      %p144 = por %p142, %p143
      %p145 = scmp.ne.s32.totalorder %s136, %s137
      %p146 = scmp.eq.s32.totalorder %s21, 0
      %p147 = por %p145, %p146
      %p148 = scmp.ne.s32.totalorder %s136, %s137
      %p149 = scmp.eq.s32.totalorder %s22, 1
      %p150 = por %p148, %p149
      %p152 = scmp.ne.s32.totalorder %s137, %s151
      %p153 = scmp.eq.s32.totalorder %s22, 0
      %p154 = por %p152, %p153
      %s156 = sadd.s32 %s155, 1
      %p159 = scmp.eq.s32.totalorder %s16, 1
      %p160 = scmp.ne.s32.totalorder %s155, %s157
      %p161 = scmp.eq.s32.totalorder %s16, 0
      %p162 = por %p160, %p161
      %p163 = scmp.ne.s32.totalorder %s155, %s157
      %p164 = scmp.eq.s32.totalorder %s21, 1
      %p165 = por %p163, %p164
      %p166 = scmp.ne.s32.totalorder %s157, %s158
      %p167 = scmp.eq.s32.totalorder %s21, 0
      %p168 = por %p166, %p167
      %p169 = scmp.ne.s32.totalorder %s157, %s158
      %p170 = scmp.eq.s32.totalorder %s22, 1
      %p171 = por %p169, %p170
      %p173 = scmp.ne.s32.totalorder %s158, %s172
      %p174 = scmp.eq.s32.totalorder %s22, 0
      %p175 = por %p173, %p174
      %s176 = ssub.s32 %s16, %s23
      %p177 = scmp.eq.s32.totalorder %s176, 0
      %s179 = sadd.s32 %s178, 1
      %s180 = scalar_select %p177, %s178, %s179
      %p183 = pneg %p177
      %p184 = scmp.eq.s32.totalorder %s16, 1
      %p185 = por %p183, %p184
      %p186 = scmp.ne.s32.totalorder %s178, %s181
      %p187 = scmp.eq.s32.totalorder %s16, 0
      %p188 = por %p186, %p187
      %p189 = scmp.ne.s32.totalorder %s178, %s181
      %p190 = scmp.eq.s32.totalorder %s21, 1
      %p191 = por %p189, %p190
      %p192 = scmp.ne.s32.totalorder %s181, %s182
      %p193 = scmp.eq.s32.totalorder %s21, 0
      %p194 = por %p192, %p193
      %p195 = scmp.ne.s32.totalorder %s181, %s182
      %p196 = scmp.eq.s32.totalorder %s22, 1
      %p197 = por %p195, %p196
      %p199 = scmp.ne.s32.totalorder %s182, %s198
      %p200 = scmp.eq.s32.totalorder %s22, 0
      %p201 = por %p199, %p200
      %p202 = scmp.le.s32.totalorder 1, %s16
      %p203 = scmp.lt.s32.totalorder %s16, 3
      %p204 = pnand %p202, %p203
      %p205 = pneg %p204
      // Predicated region
      $region9: #{mlp_protein_forward.1} parent=5 // pred_check
        _
      $region10: #{mlp_protein_forward.1} parent=5 // pred_check_branch
        %207 = sbr.rel (%p204) target = $region12
      $region11: #{mlp_protein_forward.1} parent=5 // pred_region
        %s208 = ssub.s32 %s16, 1
        // Predicated region
        $region13: #{mlp_protein_forward.1} parent=11 // pred_check
          %p209 = pneg %p63
        $region14: #{mlp_protein_forward.1} parent=11 // pred_check_branch
          %211 = sbr.rel (%p209) target = $region16
        $region15: #{mlp_protein_forward.1} parent=11 // pred_region
          _
        $region16: #{mlp_protein_forward.1} parent=11 // pred_fallthru
          _
        // Predicated region
        $region17: #{mlp_protein_forward.1} parent=11 // pred_check
          %p212 = pneg %p84
        $region18: #{mlp_protein_forward.1} parent=11 // pred_check_branch
          %214 = sbr.rel (%p212) target = $region20
        $region19: #{mlp_protein_forward.1} parent=11 // pred_region
          _
        $region20: #{mlp_protein_forward.1} parent=11 // pred_fallthru
          _
        // Predicated region
        $region21: #{mlp_protein_forward.1} parent=11 // pred_check
          %p215 = pneg %p105
        $region22: #{mlp_protein_forward.1} parent=11 // pred_check_branch
          %217 = sbr.rel (%p215) target = $region24
        $region23: #{mlp_protein_forward.1} parent=11 // pred_region
          _
        $region24: #{mlp_protein_forward.1} parent=11 // pred_fallthru
          _
        // Predicated region
        $region25: #{mlp_protein_forward.1} parent=11 // pred_check
          %p218 = pneg %p126
        $region26: #{mlp_protein_forward.1} parent=11 // pred_check_branch
          %220 = sbr.rel (%p218) target = $region28
        $region27: #{mlp_protein_forward.1} parent=11 // pred_region
          _
        $region28: #{mlp_protein_forward.1} parent=11 // pred_fallthru
          _
        // Predicated region
        $region29: #{mlp_protein_forward.1} parent=11 // pred_check
          %p221 = pneg %p147
        $region30: #{mlp_protein_forward.1} parent=11 // pred_check_branch
          %223 = sbr.rel (%p221) target = $region32
        $region31: #{mlp_protein_forward.1} parent=11 // pred_region
          _
        $region32: #{mlp_protein_forward.1} parent=11 // pred_fallthru
          _
        // Predicated region
        $region33: #{mlp_protein_forward.1} parent=11 // pred_check
          %p224 = pneg %p168
        $region34: #{mlp_protein_forward.1} parent=11 // pred_check_branch
          %226 = sbr.rel (%p224) target = $region36
        $region35: #{mlp_protein_forward.1} parent=11 // pred_region
          _
        $region36: #{mlp_protein_forward.1} parent=11 // pred_fallthru
          _
      $region12: #{mlp_protein_forward.1} parent=5 // pred_fallthru
        _
      %p227 = scmp.lt.s32.totalorder %s16, 2
      // Predicated region
      $region37: #{mlp_protein_forward.1} parent=5 // pred_check
        %p228 = pneg %p227
      $region38: #{mlp_protein_forward.1} parent=5 // pred_check_branch
        %230 = sbr.rel (%p228) target = $region40
      $region39: #{mlp_protein_forward.1} parent=5 // pred_region
        // Predicated region
        $region41: #{mlp_protein_forward.1} parent=39 // pred_check
          %p231 = pneg %p36
        $region42: #{mlp_protein_forward.1} parent=39 // pred_check_branch
          %233 = sbr.rel (%p231) target = $region44
        $region43: #{mlp_protein_forward.1} parent=39 // pred_region
          %s234 = smul.u32 16, %s16
          %s235 = ssub.s32 25, %s234
          %p236 = scmp.lt.s32.totalorder %s235, 16
          %s237 = scalar_select %p236, %s235, 16
          %s238 = smul.u32 128, %s237
          %p239 = scmp.lt.s32.totalorder %s234, 24
          %s240 = scalar_select %p239, %s234, 24
          %s241 = smul.addr %s240, 8
          %s242 = scalar_lea.vmem %s0, %s241
          %s243 = smul.u32 16, %s16
          %s244 = ssub.s32 25, %s243
          %p245 = scmp.lt.s32.totalorder %s244, 16
          %s246 = scalar_select %p245, %s244, 16
          %s247 = smul.u32 128, %s246
        $region44: #{mlp_protein_forward.1} parent=39 // pred_fallthru
          _
      $region40: #{mlp_protein_forward.1} parent=5 // pred_fallthru
        _
      %p248 = scmp.le.s32.totalorder 1, %s16
      %p249 = scmp.lt.s32.totalorder %s16, 3
      %p250 = pnand %p248, %p249
      %p251 = pneg %p250
      // Predicated region
      $region45: #{mlp_protein_forward.1} parent=5 // pred_check
        _
      $region46: #{mlp_protein_forward.1} parent=5 // pred_check_branch
        %253 = sbr.rel (%p250) target = $region48
      $region47: #{mlp_protein_forward.1} parent=5 // pred_region
        %s254 = ssub.s32 %s16, 1
        %s255 = smul.u32 16, %s21
        %s256 = ssub.s32 25, %s255
        %p257 = scmp.lt.s32.totalorder %s256, 16
        %s258 = scalar_select %p257, %s256, 16
        %s259 = smul.u32 128, %s258
        %p260 = scmp.lt.s32.totalorder %s255, 24
        %s261 = scalar_select %p260, %s255, 24
        %s262 = smul.addr %s261, 8
        %s263 = scalar_lea.vmem %s0, %s262
        %p264 = pneg %p42
        %p265 = pneg %p39
        %p266 = pneg %p63
        %p267 = pneg %p60
        %p268 = pneg %p84
        %p269 = pneg %p81
        %p270 = pneg %p105
        %p271 = pneg %p102
        %p272 = pneg %p126
        %p273 = pneg %p123
        %p274 = pneg %p147
        %p275 = pneg %p144
        %p276 = pneg %p168
        %p277 = pneg %p165
        %p278 = pneg %p194
        %p279 = pneg %p191
        %s280 = sand.u32 %s181, 1
        %s281 = scalar_lea.sflag [#allocation3], %s280
        %s282 = sand.u32 %s181, 1
        %s283 = smul.addr %s282, 128
        %s284 = scalar_lea.vmem [#allocation2], %s283
        %s285 = smul.u32 16, %s21
        %s286 = ssub.s32 25, %s285
        %p287 = scmp.lt.s32.totalorder %s286, 16
        %s288 = scalar_select %p287, %s286, 16
        %s289 = smul.u32 128, %s288
        %p290 = scmp.lt.s32.totalorder %s285, 24
        %s291 = scalar_select %p290, %s285, 24
        %s292 = smul.addr %s291, 8
        %s293 = scalar_lea.vmem %s0, %s292
        %s294 = smul.u32 16, %s21
        %s295 = ssub.s32 25, %s294
        %p296 = scmp.lt.s32.totalorder %s295, 16
        %s297 = scalar_select %p296, %s295, 16
        %s298 = smul.u32 128, %s297
        %s299 = smul.u32 16, %s21
        %s300 = ssub.s32 25, %s299
        %p301 = scmp.lt.s32.totalorder %s300, 16
        %s302 = scalar_select %p301, %s300, 16
        %s303 = smul.u32 128, %s302
        %v305 = vld [vmem:[%s293] sm:$0xff]
        %v306 = vld [vmem:[%s293 + $0x8] sm:$0xff]
        %v307 = vld [vmem:[%s293 + $0x10] sm:$0xff]
        %v308 = vld [vmem:[%s293 + $0x18] sm:$0xff]
        %v309 = vld [vmem:[%s293 + $0x20] sm:$0xff]
        %v310 = vld [vmem:[%s293 + $0x28] sm:$0xff]
        %v311 = vld [vmem:[%s293 + $0x30] sm:$0xff]
        %v312 = vld [vmem:[%s293 + $0x38] sm:$0xff]
        %v313 = vld [vmem:[%s293 + $0x40] sm:$0xff]
        %v314 = vld [vmem:[%s293 + $0x48] sm:$0xff]
        %v315 = vld [vmem:[%s293 + $0x50] sm:$0xff]
        %v316 = vld [vmem:[%s293 + $0x58] sm:$0xff]
        %v317 = vld [vmem:[%s293 + $0x60] sm:$0xff]
        %v318 = vld [vmem:[%s293 + $0x68] sm:$0xff]
        %v319 = vld [vmem:[%s293 + $0x70] sm:$0xff]
        %v320 = vld [vmem:[%s293 + $0x78] sm:$0xff]
        %v321 = vpack.c.bf16 %v306, %v305
        %v322 = vpack.c.bf16 %v308, %v307
        %v323 = vpack.c.bf16 %v310, %v309
        %v324 = vpack.c.bf16 %v312, %v311
        %v325 = vpack.c.bf16 %v314, %v313
        %v326 = vpack.c.bf16 %v316, %v315
        %v327 = vpack.c.bf16 %v318, %v317
        %v328 = vpack.c.bf16 %v320, %v319
        %v329 = vld [vmem:[%s1] sm:$0xf]
        %v330 = vld [vmem:[%s1 + $0x4] sm:$0xf]
        %v331 = vld [vmem:[%s1 + $0x8] sm:$0xf]
        %v332 = vld [vmem:[%s1 + $0xc] sm:$0xf]
        %v333 = vld [vmem:[%s1 + $0x10] sm:$0xf]
        %v334 = vld [vmem:[%s1 + $0x14] sm:$0xf]
        %v335 = vld [vmem:[%s1 + $0x18] sm:$0xf]
        %v336 = vld [vmem:[%s1 + $0x1c] sm:$0xf]
        %v337 = vld [vmem:[%s2] sm:$0x1]
        %v339 = vlaneseq
        %v340 = vshrl.u32 %v339, 7
        %v341 = vsub.s32 0, %v340
        %v342 = vrot.slane %v337, %v341
        %v352 = vunpack.c.l.b16 %v329
        %v353 = vunpack.c.l.b16 %v330
        %v354 = vunpack.c.l.b16 %v331
        %v355 = vunpack.c.l.b16 %v332
        %v356 = vunpack.c.l.b16 %v333
        %v357 = vunpack.c.l.b16 %v334
        %v358 = vunpack.c.l.b16 %v335
        %v359 = vunpack.c.l.b16 %v336
        %v360 = vpack.c.b16 %v353, %v352
        %v361 = vpack.c.b16 %v355, %v354
        %v362 = vpack.c.b16 %v357, %v356
        %v363 = vpack.c.b16 %v359, %v358
        %vm368 = vcmask 523264
        %v370 = vsel %vm368, %v321, 0
        %v373 = vsel %vm368, %v322, 0
        %v376 = vsel %vm368, %v323, 0
        %v379 = vsel %vm368, %v324, 0
        %v382 = vsel %vm368, %v325, 0
        %v385 = vsel %vm368, %v326, 0
        %v388 = vsel %vm368, %v327, 0
        %v391 = vsel %vm368, %v328, 0
        %393 = vmatprep.subr.bf16.mxu0 0
        %394 = vmatpush1.bf16.msra.mxu0 0
        %395 = vmatprep.subr.bf16.mxu0 0
        %396 = vmatpush1.bf16.msra.mxu0 0
        %397 = vmatprep.subr.bf16.mxu0 0
        %398 = vmatpush1.bf16.msra.mxu0 0
        %399 = vmatprep.subr.bf16.mxu0 0
        %400 = vmatpush1.bf16.msra.mxu0 0
        %401 = vmatprep.subr.bf16.mxu0 0
        %402 = vmatpush1.bf16.msra.mxu0 %v363
        %403 = vmatprep.subr.bf16.mxu0 0
        %404 = vmatpush1.bf16.msra.mxu0 %v362
        %405 = vmatprep.subr.bf16.mxu0 0
        %406 = vmatpush1.bf16.msra.mxu0 %v361
        %407 = vmatprep.subr.bf16.mxu0 0
        %408 = vmatpush1.bf16.msra.mxu0 %v360
        %409 = vmatprep.subr.bf16.mxu0 0
        %410 = vmatpush2.bf16.msra.mxu0 0
        %411 = vmatprep.subr.bf16.mxu0 0
        %412 = vmatpush2.bf16.msra.mxu0 0
        %413 = vmatprep.subr.bf16.mxu0 0
        %414 = vmatpush2.bf16.msra.mxu0 0
        %415 = vmatprep.subr.bf16.mxu0 0
        %416 = vmatpush2.bf16.msra.mxu0 0
        %417 = vmatprep.subr.bf16.mxu0 0
        %418 = vmatpush2.bf16.msra.mxu0 0
        %419 = vmatprep.subr.bf16.mxu0 0
        %420 = vmatpush2.bf16.msra.mxu0 0
        %421 = vmatprep.subr.bf16.mxu0 0
        %422 = vmatpush2.bf16.msra.mxu0 0
        %423 = vmatprep.subr.bf16.mxu0 0
        %424 = vmatpush2.bf16.msra.mxu0 0
        %425 = vmatprep.mubr.bf16.mxu0 0
        %426 = vmatmul.mubr.bf16.gmra.mxu0 %v370
        %v427 = vpop.f32.mrf.mxu0
        %v428 = vadd.f32 %v342, %v427
        %v429 = vpop.f32.mrf.mxu0
        %v430 = vpop.f32.mrf.mxu0
        %v431 = vadd.f32 %v342, %v430
        %v432 = vpop.f32.mrf.mxu0
        %433 = vmatprep.mubr.bf16.mxu0 0
        %434 = vmatmul.mubr.bf16.gmra.mxu0 %v373
        %v435 = vpop.f32.mrf.mxu0
        %v436 = vadd.f32 %v342, %v435
        %v437 = vpop.f32.mrf.mxu0
        %v438 = vpop.f32.mrf.mxu0
        %v439 = vadd.f32 %v342, %v438
        %v440 = vpop.f32.mrf.mxu0
        %441 = vmatprep.mubr.bf16.mxu0 0
        %442 = vmatmul.mubr.bf16.gmra.mxu0 %v376
        %v443 = vpop.f32.mrf.mxu0
        %v444 = vadd.f32 %v342, %v443
        %v445 = vpop.f32.mrf.mxu0
        %v446 = vpop.f32.mrf.mxu0
        %v447 = vadd.f32 %v342, %v446
        %v448 = vpop.f32.mrf.mxu0
        %449 = vmatprep.mubr.bf16.mxu0 0
        %450 = vmatmul.mubr.bf16.gmra.mxu0 %v379
        %v451 = vpop.f32.mrf.mxu0
        %v452 = vadd.f32 %v342, %v451
        %v453 = vpop.f32.mrf.mxu0
        %v454 = vpop.f32.mrf.mxu0
        %v455 = vadd.f32 %v342, %v454
        %v456 = vpop.f32.mrf.mxu0
        %457 = vmatprep.mubr.bf16.mxu0 0
        %458 = vmatmul.mubr.bf16.gmra.mxu0 %v382
        %v459 = vpop.f32.mrf.mxu0
        %v460 = vadd.f32 %v342, %v459
        %v461 = vpop.f32.mrf.mxu0
        %v462 = vpop.f32.mrf.mxu0
        %v463 = vadd.f32 %v342, %v462
        %v464 = vpop.f32.mrf.mxu0
        %465 = vmatprep.mubr.bf16.mxu0 0
        %466 = vmatmul.mubr.bf16.gmra.mxu0 %v385
        %v467 = vpop.f32.mrf.mxu0
        %v468 = vadd.f32 %v342, %v467
        %v469 = vpop.f32.mrf.mxu0
        %v470 = vpop.f32.mrf.mxu0
        %v471 = vadd.f32 %v342, %v470
        %v472 = vpop.f32.mrf.mxu0
        %473 = vmatprep.mubr.bf16.mxu0 0
        %474 = vmatmul.mubr.bf16.gmra.mxu0 %v388
        %v475 = vpop.f32.mrf.mxu0
        %v476 = vadd.f32 %v342, %v475
        %v477 = vpop.f32.mrf.mxu0
        %v478 = vpop.f32.mrf.mxu0
        %v479 = vadd.f32 %v342, %v478
        %v480 = vpop.f32.mrf.mxu0
        %481 = vmatprep.mubr.bf16.mxu0 0
        %482 = vmatmul.mubr.bf16.gmra.mxu0 %v391
        %v483 = vpop.f32.mrf.mxu0
        %v484 = vadd.f32 %v342, %v483
        %v485 = vpop.f32.mrf.mxu0
        %v486 = vpop.f32.mrf.mxu0
        %v487 = vadd.f32 %v342, %v486
        %v488 = vpop.f32.mrf.mxu0
        %489 = vdwg.mxu0
        %v490 = vmax.f32 %v428, 0.0
        %v491 = vmax.f32 %v431, 0.0
        %v492 = vmax.f32 %v436, 0.0
        %v493 = vmax.f32 %v439, 0.0
        %v494 = vmax.f32 %v444, 0.0
        %v495 = vmax.f32 %v447, 0.0
        %v496 = vmax.f32 %v452, 0.0
        %v497 = vmax.f32 %v455, 0.0
        %v498 = vmax.f32 %v460, 0.0
        %v499 = vmax.f32 %v463, 0.0
        %v500 = vmax.f32 %v468, 0.0
        %v501 = vmax.f32 %v471, 0.0
        %v502 = vmax.f32 %v476, 0.0
        %v503 = vmax.f32 %v479, 0.0
        %v504 = vmax.f32 %v484, 0.0
        %v505 = vmax.f32 %v487, 0.0
        %v506 = vpack.c.bf16 %v491, %v490
        %v507 = vpack.c.bf16 %v493, %v492
        %v508 = vpack.c.bf16 %v495, %v494
        %v509 = vpack.c.bf16 %v497, %v496
        %v510 = vpack.c.bf16 %v499, %v498
        %v511 = vpack.c.bf16 %v501, %v500
        %v512 = vpack.c.bf16 %v503, %v502
        %v513 = vpack.c.bf16 %v505, %v504
        %v514 = vld [vmem:[%s3] sm:$0xf]
        %v515 = vld [vmem:[%s3 + $0x4] sm:$0xf]
        %v516 = vld [vmem:[%s3 + $0x8] sm:$0xf]
        %v517 = vld [vmem:[%s3 + $0xc] sm:$0xf]
        %v518 = vld [vmem:[%s3 + $0x10] sm:$0xf]
        %v519 = vld [vmem:[%s3 + $0x14] sm:$0xf]
        %v520 = vld [vmem:[%s3 + $0x18] sm:$0xf]
        %v521 = vld [vmem:[%s3 + $0x1c] sm:$0xf]
        %v522 = vld [vmem:[%s3 + $0x20] sm:$0xf]
        %v523 = vld [vmem:[%s3 + $0x24] sm:$0xf]
        %v524 = vld [vmem:[%s3 + $0x28] sm:$0xf]
        %v525 = vld [vmem:[%s3 + $0x2c] sm:$0xf]
        %v526 = vld [vmem:[%s3 + $0x30] sm:$0xf]
        %v527 = vld [vmem:[%s3 + $0x34] sm:$0xf]
        %v528 = vld [vmem:[%s3 + $0x38] sm:$0xf]
        %v529 = vld [vmem:[%s3 + $0x3c] sm:$0xf]
        %v530 = vld [vmem:[%s4] sm:$0x1]
        %v532 = vlaneseq
        %v533 = vshrl.u32 %v532, 7
        %v534 = vsub.s32 0, %v533
        %v535 = vrot.slane %v530, %v534
        %v553 = vunpack.c.l.b16 %v514
        %v554 = vunpack.c.l.b16 %v515
        %v555 = vunpack.c.l.b16 %v516
        %v556 = vunpack.c.l.b16 %v517
        %v557 = vunpack.c.l.b16 %v518
        %v558 = vunpack.c.l.b16 %v519
        %v559 = vunpack.c.l.b16 %v520
        %v560 = vunpack.c.l.b16 %v521
        %v561 = vunpack.c.l.b16 %v522
        %v562 = vunpack.c.l.b16 %v523
        %v563 = vunpack.c.l.b16 %v524
        %v564 = vunpack.c.l.b16 %v525
        %v565 = vunpack.c.l.b16 %v526
        %v566 = vunpack.c.l.b16 %v527
        %v567 = vunpack.c.l.b16 %v528
        %v568 = vunpack.c.l.b16 %v529
        %v569 = vpack.c.b16 %v554, %v553
        %v570 = vpack.c.b16 %v556, %v555
        %v571 = vpack.c.b16 %v558, %v557
        %v572 = vpack.c.b16 %v560, %v559
        %v573 = vpack.c.b16 %v562, %v561
        %v574 = vpack.c.b16 %v564, %v563
        %v575 = vpack.c.b16 %v566, %v565
        %v576 = vpack.c.b16 %v568, %v567
        %585 = vmatprep.subr.bf16.mxu0 0
        %586 = vmatpush1.bf16.msra.mxu0 %v576
        %587 = vmatprep.subr.bf16.mxu0 0
        %588 = vmatpush1.bf16.msra.mxu0 %v575
        %589 = vmatprep.subr.bf16.mxu0 0
        %590 = vmatpush1.bf16.msra.mxu0 %v574
        %591 = vmatprep.subr.bf16.mxu0 0
        %592 = vmatpush1.bf16.msra.mxu0 %v573
        %593 = vmatprep.subr.bf16.mxu0 0
        %594 = vmatpush1.bf16.msra.mxu0 %v572
        %595 = vmatprep.subr.bf16.mxu0 0
        %596 = vmatpush1.bf16.msra.mxu0 %v571
        %597 = vmatprep.subr.bf16.mxu0 0
        %598 = vmatpush1.bf16.msra.mxu0 %v570
        %599 = vmatprep.subr.bf16.mxu0 0
        %600 = vmatpush1.bf16.msra.mxu0 %v569
        %601 = vmatprep.subr.bf16.mxu0 0
        %602 = vmatpush2.bf16.msra.mxu0 0
        %603 = vmatprep.subr.bf16.mxu0 0
        %604 = vmatpush2.bf16.msra.mxu0 0
        %605 = vmatprep.subr.bf16.mxu0 0
        %606 = vmatpush2.bf16.msra.mxu0 0
        %607 = vmatprep.subr.bf16.mxu0 0
        %608 = vmatpush2.bf16.msra.mxu0 0
        %609 = vmatprep.subr.bf16.mxu0 0
        %610 = vmatpush2.bf16.msra.mxu0 0
        %611 = vmatprep.subr.bf16.mxu0 0
        %612 = vmatpush2.bf16.msra.mxu0 0
        %613 = vmatprep.subr.bf16.mxu0 0
        %614 = vmatpush2.bf16.msra.mxu0 0
        %615 = vmatprep.subr.bf16.mxu0 0
        %616 = vmatpush2.bf16.msra.mxu0 0
        %617 = vmatprep.mubr.bf16.mxu0 0
        %618 = vmatmul.mubr.bf16.gmra.mxu0 %v506
        %v619 = vpop.f32.mrf.mxu0
        %v620 = vadd.f32 %v535, %v619
        %v621 = vpop.f32.mrf.mxu0
        %v622 = vpop.f32.mrf.mxu0
        %v623 = vadd.f32 %v535, %v622
        %v624 = vpop.f32.mrf.mxu0
        %625 = vmatprep.mubr.bf16.mxu0 0
        %626 = vmatmul.mubr.bf16.gmra.mxu0 %v507
        %v627 = vpop.f32.mrf.mxu0
        %v628 = vadd.f32 %v535, %v627
        %v629 = vpop.f32.mrf.mxu0
        %v630 = vpop.f32.mrf.mxu0
        %v631 = vadd.f32 %v535, %v630
        %v632 = vpop.f32.mrf.mxu0
        %633 = vmatprep.mubr.bf16.mxu0 0
        %634 = vmatmul.mubr.bf16.gmra.mxu0 %v508
        %v635 = vpop.f32.mrf.mxu0
        %v636 = vadd.f32 %v535, %v635
        %v637 = vpop.f32.mrf.mxu0
        %v638 = vpop.f32.mrf.mxu0
        %v639 = vadd.f32 %v535, %v638
        %v640 = vpop.f32.mrf.mxu0
        %641 = vmatprep.mubr.bf16.mxu0 0
        %642 = vmatmul.mubr.bf16.gmra.mxu0 %v509
        %v643 = vpop.f32.mrf.mxu0
        %v644 = vadd.f32 %v535, %v643
        %v645 = vpop.f32.mrf.mxu0
        %v646 = vpop.f32.mrf.mxu0
        %v647 = vadd.f32 %v535, %v646
        %v648 = vpop.f32.mrf.mxu0
        %649 = vmatprep.mubr.bf16.mxu0 0
        %650 = vmatmul.mubr.bf16.gmra.mxu0 %v510
        %v651 = vpop.f32.mrf.mxu0
        %v652 = vadd.f32 %v535, %v651
        %v653 = vpop.f32.mrf.mxu0
        %v654 = vpop.f32.mrf.mxu0
        %v655 = vadd.f32 %v535, %v654
        %v656 = vpop.f32.mrf.mxu0
        %657 = vmatprep.mubr.bf16.mxu0 0
        %658 = vmatmul.mubr.bf16.gmra.mxu0 %v511
        %v659 = vpop.f32.mrf.mxu0
        %v660 = vadd.f32 %v535, %v659
        %v661 = vpop.f32.mrf.mxu0
        %v662 = vpop.f32.mrf.mxu0
        %v663 = vadd.f32 %v535, %v662
        %v664 = vpop.f32.mrf.mxu0
        %665 = vmatprep.mubr.bf16.mxu0 0
        %666 = vmatmul.mubr.bf16.gmra.mxu0 %v512
        %v667 = vpop.f32.mrf.mxu0
        %v668 = vadd.f32 %v535, %v667
        %v669 = vpop.f32.mrf.mxu0
        %v670 = vpop.f32.mrf.mxu0
        %v671 = vadd.f32 %v535, %v670
        %v672 = vpop.f32.mrf.mxu0
        %673 = vmatprep.mubr.bf16.mxu0 0
        %674 = vmatmul.mubr.bf16.gmra.mxu0 %v513
        %v675 = vpop.f32.mrf.mxu0
        %v676 = vadd.f32 %v535, %v675
        %v677 = vpop.f32.mrf.mxu0
        %v678 = vpop.f32.mrf.mxu0
        %v679 = vadd.f32 %v535, %v678
        %v680 = vpop.f32.mrf.mxu0
        %681 = vdwg.mxu0
        %v682 = vmax.f32 %v620, 0.0
        %v683 = vmax.f32 %v623, 0.0
        %v684 = vmax.f32 %v628, 0.0
        %v685 = vmax.f32 %v631, 0.0
        %v686 = vmax.f32 %v636, 0.0
        %v687 = vmax.f32 %v639, 0.0
        %v688 = vmax.f32 %v644, 0.0
        %v689 = vmax.f32 %v647, 0.0
        %v690 = vmax.f32 %v652, 0.0
        %v691 = vmax.f32 %v655, 0.0
        %v692 = vmax.f32 %v660, 0.0
        %v693 = vmax.f32 %v663, 0.0
        %v694 = vmax.f32 %v668, 0.0
        %v695 = vmax.f32 %v671, 0.0
        %v696 = vmax.f32 %v676, 0.0
        %v697 = vmax.f32 %v679, 0.0
        %v698 = vpack.c.bf16 %v683, %v682
        %v699 = vpack.c.bf16 %v685, %v684
        %v700 = vpack.c.bf16 %v687, %v686
        %v701 = vpack.c.bf16 %v689, %v688
        %v702 = vpack.c.bf16 %v691, %v690
        %v703 = vpack.c.bf16 %v693, %v692
        %v704 = vpack.c.bf16 %v695, %v694
        %v705 = vpack.c.bf16 %v697, %v696
        %v706 = vld [vmem:[%s5] sm:$0xf]
        %v707 = vld [vmem:[%s5 + $0x4] sm:$0xf]
        %v708 = vld [vmem:[%s5 + $0x8] sm:$0xf]
        %v709 = vld [vmem:[%s5 + $0xc] sm:$0xf]
        %v710 = vld [vmem:[%s5 + $0x10] sm:$0xf]
        %v711 = vld [vmem:[%s5 + $0x14] sm:$0xf]
        %v712 = vld [vmem:[%s5 + $0x18] sm:$0xf]
        %v713 = vld [vmem:[%s5 + $0x1c] sm:$0xf]
        %v714 = vld [vmem:[%s5 + $0x20] sm:$0xf]
        %v715 = vld [vmem:[%s5 + $0x24] sm:$0xf]
        %v716 = vld [vmem:[%s5 + $0x28] sm:$0xf]
        %v717 = vld [vmem:[%s5 + $0x2c] sm:$0xf]
        %v718 = vld [vmem:[%s5 + $0x30] sm:$0xf]
        %v719 = vld [vmem:[%s5 + $0x34] sm:$0xf]
        %v720 = vld [vmem:[%s5 + $0x38] sm:$0xf]
        %v721 = vld [vmem:[%s5 + $0x3c] sm:$0xf]
        %v722 = vld [vmem:[%s6] sm:$0x1]
        %v724 = vlaneseq
        %v725 = vshrl.u32 %v724, 7
        %v726 = vsub.s32 0, %v725
        %v727 = vrot.slane %v722, %v726
        %v745 = vunpack.c.l.b16 %v706
        %v746 = vunpack.c.l.b16 %v707
        %v747 = vunpack.c.l.b16 %v708
        %v748 = vunpack.c.l.b16 %v709
        %v749 = vunpack.c.l.b16 %v710
        %v750 = vunpack.c.l.b16 %v711
        %v751 = vunpack.c.l.b16 %v712
        %v752 = vunpack.c.l.b16 %v713
        %v753 = vunpack.c.l.b16 %v714
        %v754 = vunpack.c.l.b16 %v715
        %v755 = vunpack.c.l.b16 %v716
        %v756 = vunpack.c.l.b16 %v717
        %v757 = vunpack.c.l.b16 %v718
        %v758 = vunpack.c.l.b16 %v719
        %v759 = vunpack.c.l.b16 %v720
        %v760 = vunpack.c.l.b16 %v721
        %v761 = vpack.c.b16 %v746, %v745
        %v762 = vpack.c.b16 %v748, %v747
        %v763 = vpack.c.b16 %v750, %v749
        %v764 = vpack.c.b16 %v752, %v751
        %v765 = vpack.c.b16 %v754, %v753
        %v766 = vpack.c.b16 %v756, %v755
        %v767 = vpack.c.b16 %v758, %v757
        %v768 = vpack.c.b16 %v760, %v759
        %777 = vmatprep.subr.bf16.mxu0 0
        %778 = vmatpush1.bf16.msra.mxu0 %v768
        %779 = vmatprep.subr.bf16.mxu0 0
        %780 = vmatpush1.bf16.msra.mxu0 %v767
        %781 = vmatprep.subr.bf16.mxu0 0
        %782 = vmatpush1.bf16.msra.mxu0 %v766
        %783 = vmatprep.subr.bf16.mxu0 0
        %784 = vmatpush1.bf16.msra.mxu0 %v765
        %785 = vmatprep.subr.bf16.mxu0 0
        %786 = vmatpush1.bf16.msra.mxu0 %v764
        %787 = vmatprep.subr.bf16.mxu0 0
        %788 = vmatpush1.bf16.msra.mxu0 %v763
        %789 = vmatprep.subr.bf16.mxu0 0
        %790 = vmatpush1.bf16.msra.mxu0 %v762
        %791 = vmatprep.subr.bf16.mxu0 0
        %792 = vmatpush1.bf16.msra.mxu0 %v761
        %793 = vmatprep.subr.bf16.mxu0 0
        %794 = vmatpush2.bf16.msra.mxu0 0
        %795 = vmatprep.subr.bf16.mxu0 0
        %796 = vmatpush2.bf16.msra.mxu0 0
        %797 = vmatprep.subr.bf16.mxu0 0
        %798 = vmatpush2.bf16.msra.mxu0 0
        %799 = vmatprep.subr.bf16.mxu0 0
        %800 = vmatpush2.bf16.msra.mxu0 0
        %801 = vmatprep.subr.bf16.mxu0 0
        %802 = vmatpush2.bf16.msra.mxu0 0
        %803 = vmatprep.subr.bf16.mxu0 0
        %804 = vmatpush2.bf16.msra.mxu0 0
        %805 = vmatprep.subr.bf16.mxu0 0
        %806 = vmatpush2.bf16.msra.mxu0 0
        %807 = vmatprep.subr.bf16.mxu0 0
        %808 = vmatpush2.bf16.msra.mxu0 0
        %809 = vmatprep.mubr.bf16.mxu0 0
        %810 = vmatmul.mubr.bf16.gmra.mxu0 %v698
        %v811 = vpop.f32.mrf.mxu0
        %v812 = vadd.f32 %v727, %v811
        %v813 = vpop.f32.mrf.mxu0
        %v814 = vpop.f32.mrf.mxu0
        %v815 = vadd.f32 %v727, %v814
        %v816 = vpop.f32.mrf.mxu0
        %817 = vmatprep.mubr.bf16.mxu0 0
        %818 = vmatmul.mubr.bf16.gmra.mxu0 %v699
        %v819 = vpop.f32.mrf.mxu0
        %v820 = vadd.f32 %v727, %v819
        %v821 = vpop.f32.mrf.mxu0
        %v822 = vpop.f32.mrf.mxu0
        %v823 = vadd.f32 %v727, %v822
        %v824 = vpop.f32.mrf.mxu0
        %825 = vmatprep.mubr.bf16.mxu0 0
        %826 = vmatmul.mubr.bf16.gmra.mxu0 %v700
        %v827 = vpop.f32.mrf.mxu0
        %v828 = vadd.f32 %v727, %v827
        %v829 = vpop.f32.mrf.mxu0
        %v830 = vpop.f32.mrf.mxu0
        %v831 = vadd.f32 %v727, %v830
        %v832 = vpop.f32.mrf.mxu0
        %833 = vmatprep.mubr.bf16.mxu0 0
        %834 = vmatmul.mubr.bf16.gmra.mxu0 %v701
        %v835 = vpop.f32.mrf.mxu0
        %v836 = vadd.f32 %v727, %v835
        %v837 = vpop.f32.mrf.mxu0
        %v838 = vpop.f32.mrf.mxu0
        %v839 = vadd.f32 %v727, %v838
        %v840 = vpop.f32.mrf.mxu0
        %841 = vmatprep.mubr.bf16.mxu0 0
        %842 = vmatmul.mubr.bf16.gmra.mxu0 %v702
        %v843 = vpop.f32.mrf.mxu0
        %v844 = vadd.f32 %v727, %v843
        %v845 = vpop.f32.mrf.mxu0
        %v846 = vpop.f32.mrf.mxu0
        %v847 = vadd.f32 %v727, %v846
        %v848 = vpop.f32.mrf.mxu0
        %849 = vmatprep.mubr.bf16.mxu0 0
        %850 = vmatmul.mubr.bf16.gmra.mxu0 %v703
        %v851 = vpop.f32.mrf.mxu0
        %v852 = vadd.f32 %v727, %v851
        %v853 = vpop.f32.mrf.mxu0
        %v854 = vpop.f32.mrf.mxu0
        %v855 = vadd.f32 %v727, %v854
        %v856 = vpop.f32.mrf.mxu0
        %857 = vmatprep.mubr.bf16.mxu0 0
        %858 = vmatmul.mubr.bf16.gmra.mxu0 %v704
        %v859 = vpop.f32.mrf.mxu0
        %v860 = vadd.f32 %v727, %v859
        %v861 = vpop.f32.mrf.mxu0
        %v862 = vpop.f32.mrf.mxu0
        %v863 = vadd.f32 %v727, %v862
        %v864 = vpop.f32.mrf.mxu0
        %865 = vmatprep.mubr.bf16.mxu0 0
        %866 = vmatmul.mubr.bf16.gmra.mxu0 %v705
        %v867 = vpop.f32.mrf.mxu0
        %v868 = vadd.f32 %v727, %v867
        %v869 = vpop.f32.mrf.mxu0
        %v870 = vpop.f32.mrf.mxu0
        %v871 = vadd.f32 %v727, %v870
        %v872 = vpop.f32.mrf.mxu0
        %873 = vdwg.mxu0
        %874 = vst [vmem:[%s284] sm:$0xff] %v812
        %875 = vst [vmem:[%s284 + $0x8] sm:$0xff] %v815
        %876 = vst [vmem:[%s284 + $0x10] sm:$0xff] %v820
        %877 = vst [vmem:[%s284 + $0x18] sm:$0xff] %v823
        %878 = vst [vmem:[%s284 + $0x20] sm:$0xff] %v828
        %879 = vst [vmem:[%s284 + $0x28] sm:$0xff] %v831
        %880 = vst [vmem:[%s284 + $0x30] sm:$0xff] %v836
        %881 = vst [vmem:[%s284 + $0x38] sm:$0xff] %v839
        %882 = vst [vmem:[%s284 + $0x40] sm:$0xff] %v844
        %883 = vst [vmem:[%s284 + $0x48] sm:$0xff] %v847
        %884 = vst [vmem:[%s284 + $0x50] sm:$0xff] %v852
        %885 = vst [vmem:[%s284 + $0x58] sm:$0xff] %v855
        %886 = vst [vmem:[%s284 + $0x60] sm:$0xff] %v860
        %887 = vst [vmem:[%s284 + $0x68] sm:$0xff] %v863
        %888 = vst [vmem:[%s284 + $0x70] sm:$0xff] %v868
        %889 = vst [vmem:[%s284 + $0x78] sm:$0xff] %v871
        %s890 = sand.u32 %s181, 1
        %s891 = scalar_lea.sflag [#allocation3], %s890
        %s892 = sand.u32 %s181, 1
        %s893 = smul.addr %s892, 128
        %s894 = scalar_lea.vmem [#allocation2], %s893
        // Predicated region
        $region49: #{mlp_protein_forward.1} parent=47 // pred_check
          %p895 = pneg %p191
        $region50: #{mlp_protein_forward.1} parent=47 // pred_check_branch
          %897 = sbr.rel (%p895) target = $region52
        $region51: #{mlp_protein_forward.1} parent=47 // pred_region
          %s898 = smul.u32 16, %s21
          %s899 = ssub.s32 25, %s898
          %p900 = scmp.lt.s32.totalorder %s899, 16
          %s901 = scalar_select %p900, %s899, 16
          %s902 = smul.u32 128, %s901
          %s904 = ssub.s32 2048, %s902
          %905 = vsyncadd %s891, %s904
          %p906 = scmp.ne.s32.totalorder 0, %s902
          %s907 = smul.addr %s898, 128
          %s908 = scalar_lea.hbm %s7, %s907
          %s909 = smul.u32 8, %s901
          %s910 = sshll.u32 %s894, 4
          %s911 = int_to_ptr.vmem [resolvable:$true] %s910
          %s912 = sshll.u32 %s909, 4
          %916 = dma.vmem_to_hbm [thread:$0]  (%p906), %s911, %s912, %s908, %s891, 128, 128, 8
        $region52: #{mlp_protein_forward.1} parent=47 // pred_fallthru
          _
      $region48: #{mlp_protein_forward.1} parent=5 // pred_fallthru
        _
      %p917 = scmp.le.s32.totalorder 2, %s16
      // Predicated region
      $region53: #{mlp_protein_forward.1} parent=5 // pred_check
        %p918 = pneg %p917
      $region54: #{mlp_protein_forward.1} parent=5 // pred_check_branch
        %920 = sbr.rel (%p918) target = $region56
      $region55: #{mlp_protein_forward.1} parent=5 // pred_region
        %s921 = ssub.s32 %s16, 2
        // Predicated region
        $region57: #{mlp_protein_forward.1} parent=55 // pred_check
          %p922 = pneg %p197
        $region58: #{mlp_protein_forward.1} parent=55 // pred_check_branch
          %924 = sbr.rel (%p922) target = $region60
        $region59: #{mlp_protein_forward.1} parent=55 // pred_region
          %s925 = sand.u32 %s182, 1
          %s926 = scalar_lea.sflag [#allocation3], %s925
          %s927 = sand.u32 %s182, 1
          %s928 = smul.addr %s927, 128
          %s929 = scalar_lea.vmem [#allocation2], %s928
          %930 = dma.done %s926, 2048
        $region60: #{mlp_protein_forward.1} parent=55 // pred_fallthru
          _
      $region56: #{mlp_protein_forward.1} parent=5 // pred_fallthru
        _
    $region6: #{mlp_protein_forward.1} parent=1 // loop_footer
      %s20 = sadd.s32 1, %s16
    $region7: #{mlp_protein_forward.1} parent=1 // loop_footer_branch
      %15 = sbr.rel target = $region3
    $region8: #{mlp_protein_forward.1} parent=1 // loop_exit
      _
    %931 = vsyncpa [#allocation3], 1
    %s932 = scalar_lea.sflag [#allocation3], 1
    %933 = vsyncpa %s932, 1

</llo_original>
